<compile_context>
chip_gen: v6e
topology: v6e:2x2x1
jax: 0.10.0
libtpu: 0.0.40
codegen_flags: <defaults>
</compile_context>

<pallas_src>
import numpy as np
import jax
import jax.numpy as jnp
from jax import lax
from jax.experimental import pallas as pl
from jax.experimental.pallas import tpu as pltpu


def convnet_kernel(x_ref, turn_ref, w_eff_ref, b_eff_ref, wd01_ref, bmid_ref,
                   wd00_ref, wd1_ref, b1_ref, out_ref):
    """Fused forward: 4 small lane-dense MXU matmuls + 2 ReLUs.

    x    : (TB, 64)  float (any) -> cast to bf16 in-kernel
    turn : (TB, 16)  float (any), cols 10..15 zero -> bf16 in-kernel
    w_eff: (64, 128) bf16  folded conv0 -> conv1 -> NCHW flatten
    b_eff: (1, 128)  f32
    wd01 : (16, 128) bf16  dense01 weight (rows 10..15 zero)
    bmid : (1, 128)  f32   dense00.bias + dense01.bias
    wd00 : (128,128) bf16  dense00 weight (in, out)
    wd1  : (128,128) bf16  dense1 weight padded to 128 output lanes
    b1   : (1, 128)  f32   dense1 bias padded
    out  : (TB, 128) lanes 0..63 carry the real output
    """
    x = x_ref[...].astype(jnp.bfloat16)
    t = turn_ref[...].astype(jnp.bfloat16)
    # Folded conv0∘conv1∘flatten (exact affine map), K=64.
    zc = jnp.dot(x, w_eff_ref[...],
                 preferred_element_type=jnp.float32) + b_eff_ref[...]
    h0 = jnp.maximum(zc, 0.0).astype(jnp.bfloat16)
    # dense01(turn), K=16 (zero-padded rows/cols are exact no-ops).
    zt = jnp.dot(t, wd01_ref[...], preferred_element_type=jnp.float32)
    # dense00(h0) + dense01(turn) + biases, relu.
    z1 = jnp.dot(h0, wd00_ref[...],
                 preferred_element_type=jnp.float32) + zt + bmid_ref[...]
    h1 = jnp.maximum(z1, 0.0).astype(jnp.bfloat16)
    # dense1, padded to a lane-dense 128-wide output (real lanes = [:64]).
    out_ref[...] = (jnp.dot(h1, wd1_ref[...],
                            preferred_element_type=jnp.float32)
                    + b1_ref[...]).astype(out_ref.dtype)


def _fold_convs(p):
    """Fold conv0∘conv1∘NCHW-flatten into x_flat @ W_eff + b_eff (exact)."""
    dn = ("NCHW", "OIHW", "NCHW")
    # Linear part: push a 64-image identity basis (no biases) through both convs.
    basis = jnp.eye(64, dtype=jnp.float32).reshape(64, 1, 8, 8)
    c0 = lax.conv_general_dilated(basis, p["conv0_w"], (1, 1), "VALID",
                                  dimension_numbers=dn)
    c1 = lax.conv_general_dilated(c0, p["conv1_w"], (1, 1), "VALID",
                                  dimension_numbers=dn)
    w_eff = c1.reshape(64, 128)                    # (x_flat idx, NCHW flat idx)
    # Affine part: response of both convs (with biases) to the zero image.
    z = jnp.zeros((1, 1, 8, 8), jnp.float32)
    c0b = lax.conv_general_dilated(z, p["conv0_w"], (1, 1), "VALID",
                                   dimension_numbers=dn)
    c0b = c0b + p["conv0_b"][None, :, None, None]
    c1b = lax.conv_general_dilated(c0b, p["conv1_w"], (1, 1), "VALID",
                                   dimension_numbers=dn)
    c1b = c1b + p["conv1_b"][None, :, None, None]
    return w_eff, c1b.reshape(128)


def prepare_params(p):
    """One-time fold/pack/cast of module params into kernel operands.

    Call once per parameter set (outside the per-step path) and pass the
    result dict to convnet_two_sides.
    """
    w_eff, b_eff = _fold_convs(p)
    wd01 = jnp.zeros((16, 128), jnp.float32).at[:10, :].set(p["d01_w"].T)
    wd1 = jnp.zeros((128, 128), jnp.float32).at[:, :64].set(p["d1_w"].T)
    b1 = jnp.zeros((1, 128), jnp.float32).at[:, :64].set(p["d1_b"])
    return dict(
        w_eff=w_eff.astype(jnp.bfloat16),
        b_eff=b_eff.reshape(1, 128).astype(jnp.float32),
        wd01=wd01.astype(jnp.bfloat16),
        bmid=(p["d00_b"] + p["d01_b"]).reshape(1, 128).astype(jnp.float32),
        wd00=p["d00_w"].T.astype(jnp.bfloat16),
        wd1=wd1.astype(jnp.bfloat16),
        b1=b1,
    )


def convnet_two_sides(x_nchw, turn, packed, *, max_tb=2048,
                      out_dtype=jnp.float32, return_padded=False):
    """Forward pass. `packed` comes from prepare_params() (precomputed once).

    out_dtype=jnp.bfloat16 halves output writeback traffic; return_padded=True
    skips the wrapper slice and returns the (B, 128) lane-dense slab (only
    lanes 0..63 are meaningful; if B % tile != 0 the trailing padded rows of
    the last block are unspecified).
    """
    B = x_nchw.shape[0]
    # Free (metadata) reshape; dtype left as-is — the bf16 cast happens inside
    # the kernel, so there is no wrapper-side HBM pass over x.
    x_flat = x_nchw.reshape(B, 64)
    # Pad turn's 10 features to 16 lanes (tiny; keeps the K dim sublane-clean).
    turn16 = jnp.pad(turn, ((0, 0), (0, 6)))

    # Batch tile: full B when small; otherwise a multiple of 8 chosen so the
    # "parallel" grid has >=2 steps (lets v7x shard across both TensorCores)
    # while staying <= max_tb (working set is ~4 KiB/row double-buffered).
    if B <= 1024:
        tb = B
    else:
        tb = min(max_tb, ((B + 1) // 2 + 7) // 8 * 8)
    grid_steps = pl.cdiv(B, tb)

    # Deeper pipelining only pays when tiles are small and there are several
    # grid steps (per-step DMA barely hidden at the default depth-2).
    deep = grid_steps >= 3 and tb <= 512

    def io_spec(ncols):
        if deep:
            return pl.BlockSpec((tb, ncols), lambda i: (i, 0),
                                pipeline_mode=pl.Buffered(3))
        return pl.BlockSpec((tb, ncols), lambda i: (i, 0))

    def const_spec(a):
        nd = a.ndim
        return pl.BlockSpec(a.shape, lambda i, _nd=nd: (0,) * _nd)

    weights = (packed["w_eff"], packed["b_eff"], packed["wd01"],
               packed["bmid"], packed["wd00"], packed["wd1"], packed["b1"])

    weight_bytes = sum(int(np.prod(w.shape)) * w.dtype.itemsize
                       for w in weights)
    in_bytes = B * (64 * x_flat.dtype.itemsize + 16 * turn16.dtype.itemsize)
    out_bytes = B * 128 * jnp.dtype(out_dtype).itemsize
    cost = pl.CostEstimate(
        flops=2 * B * 128 * (64 + 16 + 128 + 128),
        transcendentals=0,
        bytes_accessed=in_bytes + out_bytes + weight_bytes,
    )

    out = pl.pallas_call(
        convnet_kernel,
        out_shape=jax.ShapeDtypeStruct((B, 128), out_dtype),
        grid=(grid_steps,),
        in_specs=[io_spec(64), io_spec(16)] + [const_spec(w) for w in weights],
        out_specs=io_spec(128),
        compiler_params=pltpu.CompilerParams(
            dimension_semantics=("parallel",),
            vmem_limit_bytes=48 * 1024 * 1024,
        ),
        cost_estimate=cost,
    )(x_flat, turn16, *weights)

    if return_padded:
        return out
    return out[:, :64]


def ref_forward(x_nchw, turn, p):
    """Pure-JAX reference mirroring the PyTorch module exactly (NCHW, f32)."""
    dn = ("NCHW", "OIHW", "NCHW")
    c0 = lax.conv_general_dilated(x_nchw, p["conv0_w"], (1, 1), "VALID",
                                  dimension_numbers=dn)
    c0 = c0 + p["conv0_b"][None, :, None, None]
    c1 = lax.conv_general_dilated(c0, p["conv1_w"], (1, 1), "VALID",
                                  dimension_numbers=dn)
    c1 = c1 + p["conv1_b"][None, :, None, None]
    h0 = jax.nn.relu(c1.reshape(c1.shape[0], -1))                  # (B, 128)
    h1 = jax.nn.relu(h0 @ p["d00_w"].T + p["d00_b"]
                     + turn @ p["d01_w"].T + p["d01_b"])
    return h1 @ p["d1_w"].T + p["d1_b"]


if __name__ == "__main__":
    key = jax.random.PRNGKey(0)
    keys = jax.random.split(key, 12)
    B = 2

    x = jax.random.normal(keys[0], (B, 1, 8, 8), jnp.float32)
    turn = jax.random.normal(keys[1], (B, 10), jnp.float32)

    def w(k, shape):
        return 0.1 * jax.random.normal(k, shape, jnp.float32)

    params = dict(
        conv0_w=w(keys[2], (5, 1, 3, 3)),  conv0_b=w(keys[3], (5,)),
        conv1_w=w(keys[4], (8, 5, 3, 3)),  conv1_b=w(keys[5], (8,)),
        d00_w=w(keys[6], (128, 128)),      d00_b=w(keys[7], (128,)),
        d01_w=w(keys[8], (128, 10)),       d01_b=w(keys[9], (128,)),
        d1_w=w(keys[10], (64, 128)),       d1_b=w(keys[11], (64,)),
    )

    # One-time weight folding/packing — hoisted out of the per-call path.
    packed = prepare_params(params)

    fwd = jax.jit(convnet_two_sides)
    out = fwd(x, turn, packed)
    jax.block_until_ready(out)

    ref = ref_forward(x, turn, params)
    assert out.shape == (B, 64)
    if not np.allclose(np.asarray(out), np.asarray(ref), atol=2e-2, rtol=2e-2):
        raise AssertionError("Pallas kernel output mismatch vs JAX reference")

    print("KERNEL_OK")
</pallas_src>

<mosaic_0001>
module attributes {stable_mosaic.version = 11 : i64} {
  func.func @convnet_kernel(%arg0: i32, %arg1: memref<2x64xf32, #tpu.memory_space<vmem>>, %arg2: memref<2x16xf32, #tpu.memory_space<vmem>>, %arg3: memref<64x128xbf16, #tpu.memory_space<vmem>>, %arg4: memref<1x128xf32, #tpu.memory_space<vmem>>, %arg5: memref<16x128xbf16, #tpu.memory_space<vmem>>, %arg6: memref<1x128xf32, #tpu.memory_space<vmem>>, %arg7: memref<128x128xbf16, #tpu.memory_space<vmem>>, %arg8: memref<128x128xbf16, #tpu.memory_space<vmem>>, %arg9: memref<1x128xf32, #tpu.memory_space<vmem>>, %arg10: memref<2x128xf32, #tpu.memory_space<vmem>>) attributes {dimension_semantics = [#tpu.dimension_semantics<parallel>], iteration_bounds = array<i64: 1>, scalar_prefetch = 0 : i64, scratch_operands = 0 : i64, tpu.core_type = #tpu.core_type<tc>, window_params = [{transform_indices = @transform_0, window_bounds = array<i64: 2, 64>}, {transform_indices = @transform_1, window_bounds = array<i64: 2, 16>}, {pipeline_mode = #tpu.pipeline_mode<synchronous>, transform_indices = @transform_2, window_bounds = array<i64: 64, 128>}, {pipeline_mode = #tpu.pipeline_mode<synchronous>, transform_indices = @transform_3, window_bounds = array<i64: 1, 128>}, {pipeline_mode = #tpu.pipeline_mode<synchronous>, transform_indices = @transform_4, window_bounds = array<i64: 16, 128>}, {pipeline_mode = #tpu.pipeline_mode<synchronous>, transform_indices = @transform_5, window_bounds = array<i64: 1, 128>}, {pipeline_mode = #tpu.pipeline_mode<synchronous>, transform_indices = @transform_6, window_bounds = array<i64: 128, 128>}, {pipeline_mode = #tpu.pipeline_mode<synchronous>, transform_indices = @transform_7, window_bounds = array<i64: 128, 128>}, {pipeline_mode = #tpu.pipeline_mode<synchronous>, transform_indices = @transform_8, window_bounds = array<i64: 1, 128>}, {transform_indices = @transform_9, window_bounds = array<i64: 2, 128>}]} {
    %c0 = arith.constant 0 : index
    %c0_0 = arith.constant 0 : index
    %0 = vector.load %arg1[%c0, %c0_0] : memref<2x64xf32, #tpu.memory_space<vmem>>, vector<2x64xf32>
    %1 = arith.truncf %0 : vector<2x64xf32> to vector<2x64xbf16>
    %c0_1 = arith.constant 0 : index
    %c0_2 = arith.constant 0 : index
    %2 = vector.load %arg2[%c0_1, %c0_2] : memref<2x16xf32, #tpu.memory_space<vmem>>, vector<2x16xf32>
    %3 = arith.truncf %2 : vector<2x16xf32> to vector<2x16xbf16>
    %c0_3 = arith.constant 0 : index
    %c0_4 = arith.constant 0 : index
    %4 = vector.load %arg3[%c0_3, %c0_4] : memref<64x128xbf16, #tpu.memory_space<vmem>>, vector<64x128xbf16>
    %cst = arith.constant dense<0.000000e+00> : vector<2x128xf32>
    %5 = tpu.matmul %1, %4, %cst {dimension_numbers = #tpu.dot_dimension_numbers<[1], [0], [0], [1], [0, 0, 1, 1], [], []>} : vector<2x64xbf16>, vector<64x128xbf16>, vector<2x128xf32> -> vector<2x128xf32>
    %c0_5 = arith.constant 0 : index
    %c0_6 = arith.constant 0 : index
    %6 = vector.load %arg4[%c0_5, %c0_6] : memref<1x128xf32, #tpu.memory_space<vmem>>, vector<1x128xf32>
    %7 = vector.broadcast %6 : vector<1x128xf32> to vector<2x128xf32>
    %8 = arith.addf %5, %7 : vector<2x128xf32>
    %cst_7 = arith.constant 0.000000e+00 : f32
    %9 = vector.broadcast %cst_7 : f32 to vector<2x128xf32>
    %10 = arith.maximumf %8, %9 : vector<2x128xf32>
    %11 = arith.truncf %10 : vector<2x128xf32> to vector<2x128xbf16>
    %c0_8 = arith.constant 0 : index
    %c0_9 = arith.constant 0 : index
    %12 = vector.load %arg5[%c0_8, %c0_9] : memref<16x128xbf16, #tpu.memory_space<vmem>>, vector<16x128xbf16>
    %cst_10 = arith.constant dense<0.000000e+00> : vector<2x128xf32>
    %13 = tpu.matmul %3, %12, %cst_10 {dimension_numbers = #tpu.dot_dimension_numbers<[1], [0], [0], [1], [0, 0, 1, 1], [], []>} : vector<2x16xbf16>, vector<16x128xbf16>, vector<2x128xf32> -> vector<2x128xf32>
    %c0_11 = arith.constant 0 : index
    %c0_12 = arith.constant 0 : index
    %14 = vector.load %arg7[%c0_11, %c0_12] : memref<128x128xbf16, #tpu.memory_space<vmem>>, vector<128x128xbf16>
    %cst_13 = arith.constant dense<0.000000e+00> : vector<2x128xf32>
    %15 = tpu.matmul %11, %14, %cst_13 {dimension_numbers = #tpu.dot_dimension_numbers<[1], [0], [0], [1], [0, 0, 1, 1], [], []>} : vector<2x128xbf16>, vector<128x128xbf16>, vector<2x128xf32> -> vector<2x128xf32>
    %16 = arith.addf %15, %13 : vector<2x128xf32>
    %c0_14 = arith.constant 0 : index
    %c0_15 = arith.constant 0 : index
    %17 = vector.load %arg6[%c0_14, %c0_15] : memref<1x128xf32, #tpu.memory_space<vmem>>, vector<1x128xf32>
    %18 = vector.broadcast %17 : vector<1x128xf32> to vector<2x128xf32>
    %19 = arith.addf %16, %18 : vector<2x128xf32>
    %cst_16 = arith.constant 0.000000e+00 : f32
    %20 = vector.broadcast %cst_16 : f32 to vector<2x128xf32>
    %21 = arith.maximumf %19, %20 : vector<2x128xf32>
    %22 = arith.truncf %21 : vector<2x128xf32> to vector<2x128xbf16>
    %c0_17 = arith.constant 0 : index
    %c0_18 = arith.constant 0 : index
    %23 = vector.load %arg8[%c0_17, %c0_18] : memref<128x128xbf16, #tpu.memory_space<vmem>>, vector<128x128xbf16>
    %cst_19 = arith.constant dense<0.000000e+00> : vector<2x128xf32>
    %24 = tpu.matmul %22, %23, %cst_19 {dimension_numbers = #tpu.dot_dimension_numbers<[1], [0], [0], [1], [0, 0, 1, 1], [], []>} : vector<2x128xbf16>, vector<128x128xbf16>, vector<2x128xf32> -> vector<2x128xf32>
    %c0_20 = arith.constant 0 : index
    %c0_21 = arith.constant 0 : index
    %25 = vector.load %arg9[%c0_20, %c0_21] : memref<1x128xf32, #tpu.memory_space<vmem>>, vector<1x128xf32>
    %26 = vector.broadcast %25 : vector<1x128xf32> to vector<2x128xf32>
    %27 = arith.addf %24, %26 : vector<2x128xf32>
    %c0_22 = arith.constant 0 : index
    %c0_23 = arith.constant 0 : index
    %28 = vector.load %arg10[%c0_22, %c0_23] : memref<2x128xf32, #tpu.memory_space<vmem>>, vector<2x128xf32>
    tpu.vector_store %arg10[%c0_22, %c0_23], %27 {strides = array<i32>} : memref<2x128xf32, #tpu.memory_space<vmem>>, vector<2x128xf32>,
    return
  }
  func.func @transform_0(%arg0: i32) -> (i32, i32) {
    %c0_i32 = arith.constant 0 : i32
    %c0_i32_0 = arith.constant 0 : i32
    return %arg0, %c0_i32 : i32, i32
  }
  func.func @transform_1(%arg0: i32) -> (i32, i32) {
    %c0_i32 = arith.constant 0 : i32
    %c0_i32_0 = arith.constant 0 : i32
    return %arg0, %c0_i32 : i32, i32
  }
  func.func @transform_2(%arg0: i32) -> (i32, i32) {
    %c0_i32 = arith.constant 0 : i32
    %c0_i32_0 = arith.constant 0 : i32
    %c0_i32_1 = arith.constant 0 : i32
    return %c0_i32, %c0_i32_0 : i32, i32
  }
  func.func @transform_3(%arg0: i32) -> (i32, i32) {
    %c0_i32 = arith.constant 0 : i32
    %c0_i32_0 = arith.constant 0 : i32
    %c0_i32_1 = arith.constant 0 : i32
    return %c0_i32, %c0_i32_0 : i32, i32
  }
  func.func @transform_4(%arg0: i32) -> (i32, i32) {
    %c0_i32 = arith.constant 0 : i32
    %c0_i32_0 = arith.constant 0 : i32
    %c0_i32_1 = arith.constant 0 : i32
    return %c0_i32, %c0_i32_0 : i32, i32
  }
  func.func @transform_5(%arg0: i32) -> (i32, i32) {
    %c0_i32 = arith.constant 0 : i32
    %c0_i32_0 = arith.constant 0 : i32
    %c0_i32_1 = arith.constant 0 : i32
    return %c0_i32, %c0_i32_0 : i32, i32
  }
  func.func @transform_6(%arg0: i32) -> (i32, i32) {
    %c0_i32 = arith.constant 0 : i32
    %c0_i32_0 = arith.constant 0 : i32
    %c0_i32_1 = arith.constant 0 : i32
    return %c0_i32, %c0_i32_0 : i32, i32
  }
  func.func @transform_7(%arg0: i32) -> (i32, i32) {
    %c0_i32 = arith.constant 0 : i32
    %c0_i32_0 = arith.constant 0 : i32
    %c0_i32_1 = arith.constant 0 : i32
    return %c0_i32, %c0_i32_0 : i32, i32
  }
  func.func @transform_8(%arg0: i32) -> (i32, i32) {
    %c0_i32 = arith.constant 0 : i32
    %c0_i32_0 = arith.constant 0 : i32
    %c0_i32_1 = arith.constant 0 : i32
    return %c0_i32, %c0_i32_0 : i32, i32
  }
  func.func @transform_9(%arg0: i32) -> (i32, i32) {
    %c0_i32 = arith.constant 0 : i32
    %c0_i32_0 = arith.constant 0 : i32
    return %arg0, %c0_i32 : i32, i32
  }
}

</mosaic_0001>

<llo_original>
// kernel: convnet_two_sides.1
$region0: #{convnet_two_sides.1}
  #allocation0 [shape = 'u32[]', space=smem, size = 0x4, offset = 0x4, fixed_abs, tag = 'smem constant byte address 0x4 - core index']
  #allocation1 [shape = 'u32[144,128]{1,0:T(1,128)}', space=vmem, size = 0x12000, scoped, tag = 'internal scratch']
  %s0 = inlined_call_operand.vmem [shape: f32[2,64], index: 0, kind: input, shape index: {}]
  %s1 = inlined_call_operand.vmem [shape: f32[2,16], index: 1, kind: input, shape index: {}]
  %s2 = inlined_call_operand.vmem [shape: bf16[64,128], index: 2, kind: input, shape index: {}]
  %s3 = inlined_call_operand.hbm [shape: f32[1,128], index: 3, kind: input, shape index: {}]
  %s4 = inlined_call_operand.hbm [shape: bf16[16,128], index: 4, kind: input, shape index: {}]
  %s5 = inlined_call_operand.hbm [shape: f32[1,128], index: 5, kind: input, shape index: {}]
  %s6 = inlined_call_operand.hbm [shape: bf16[128,128], index: 6, kind: input, shape index: {}]
  %s7 = inlined_call_operand.hbm [shape: bf16[128,128], index: 7, kind: input, shape index: {}]
  %s8 = inlined_call_operand.hbm [shape: f32[1,128], index: 8, kind: input, shape index: {}]
  %s9 = inlined_call_operand.hbm [shape: f32[2,128], index: 9, kind: output, shape index: {}]
  %s10 = sld [smem:[#allocation0]]
  $region70: #{convnet_two_sides.1} parent=0
    _
  %s12 = ssub.s32 1, %s10
  %s13 = scalar_select 0, %s12, %s10
  $region1: #{convnet_two_sides.1} parent=0
    #allocation2 [shape = 'u8[512]{0}', space=vmem, size = 0x400, scoped, tag = 'input window, operand 3, single buffered']
    #allocation3 [shape = 's32[1]{0}', space=sflag, size = 0x4, scoped, tag = 'scoped memory for convnet_two_sides.1']
    #allocation4 [shape = 's32[1]{0}', space=sflag, size = 0x4, scoped, tag = 'scoped memory for convnet_two_sides.1']
    #allocation5 [shape = 'u8[4096]{0}', space=vmem, size = 0x1000, scoped, tag = 'input window, operand 4, single buffered']
    #allocation6 [shape = 's32[1]{0}', space=sflag, size = 0x4, scoped, tag = 'scoped memory for convnet_two_sides.1']
    #allocation7 [shape = 'u8[512]{0}', space=vmem, size = 0x400, scoped, tag = 'input window, operand 5, single buffered']
    #allocation8 [shape = 'u8[32768]{0}', space=vmem, size = 0x8000, scoped, tag = 'input window, operand 6, single buffered']
    #allocation9 [shape = 's32[1]{0}', space=sflag, size = 0x4, scoped, tag = 'scoped memory for convnet_two_sides.1']
    #allocation10 [shape = 'u8[32768]{0}', space=vmem, size = 0x8000, scoped, tag = 'input window, operand 7, single buffered']
    #allocation11 [shape = 'u8[512]{0}', space=vmem, size = 0x400, scoped, tag = 'input window, operand 8, single buffered']
    #allocation12 [shape = 's32[1]{0}', space=sflag, size = 0x4, scoped, tag = 'scoped memory for convnet_two_sides.1']
    #allocation13 [shape = 'u8[1024]{0}', space=vmem, size = 0x400, scoped, tag = 'output window, operand 0, single buffered']
    %14 = vsyncpa [#allocation3], 0
    %15 = vsyncpa [#allocation6], 0
    %16 = vsyncpa [#allocation9], 0
    %17 = vsyncpa [#allocation12], 0
    %18 = vsyncpa [#allocation4], 0
    // Predicated region
    $region2: #{convnet_two_sides.1} parent=1 // pred_check
      _
    $region3: #{convnet_two_sides.1} parent=1 // pred_check_branch
      %20 = sbr.rel (0) target = $region5
    $region4: #{convnet_two_sides.1} parent=1 // pred_region
      _
    $region5: #{convnet_two_sides.1} parent=1 // pred_fallthru
      _
    // Predicated region
    $region6: #{convnet_two_sides.1} parent=1 // pred_check
      _
    $region7: #{convnet_two_sides.1} parent=1 // pred_check_branch
      %22 = sbr.rel (0) target = $region9
    $region8: #{convnet_two_sides.1} parent=1 // pred_region
      _
    $region9: #{convnet_two_sides.1} parent=1 // pred_fallthru
      _
    // Predicated region
    $region10: #{convnet_two_sides.1} parent=1 // pred_check
      _
    $region11: #{convnet_two_sides.1} parent=1 // pred_check_branch
      %24 = sbr.rel (0) target = $region13
    $region12: #{convnet_two_sides.1} parent=1 // pred_region
      _
    $region13: #{convnet_two_sides.1} parent=1 // pred_fallthru
      _
    // Predicated region
    $region14: #{convnet_two_sides.1} parent=1 // pred_check
      _
    $region15: #{convnet_two_sides.1} parent=1 // pred_check_branch
      %26 = sbr.rel (0) target = $region17
    $region16: #{convnet_two_sides.1} parent=1 // pred_region
      %s28 = ssub.s32 16, 16
      %29 = vsyncadd [#allocation3], %s28
      %s31 = sshll.u32 [#allocation2], 4
      %s32 = int_to_ptr.vmem [resolvable:$true] %s31
      %34 = dma.hbm_to_vmem [thread:$0]  %s3, 16, %s32, [#allocation3]
    $region17: #{convnet_two_sides.1} parent=1 // pred_fallthru
      _
    // Predicated region
    $region18: #{convnet_two_sides.1} parent=1 // pred_check
      _
    $region19: #{convnet_two_sides.1} parent=1 // pred_check_branch
      %36 = sbr.rel (0) target = $region21
    $region20: #{convnet_two_sides.1} parent=1 // pred_region
      %s38 = ssub.s32 128, 128
      %39 = vsyncadd [#allocation6], %s38
      %s40 = sshll.u32 [#allocation5], 4
      %s41 = int_to_ptr.vmem [resolvable:$true] %s40
      %46 = dma.hbm_to_vmem [thread:$0]  %s4, 128, %s41, [#allocation6], 64, 64, 4
    $region21: #{convnet_two_sides.1} parent=1 // pred_fallthru
      _
    // Predicated region
    $region22: #{convnet_two_sides.1} parent=1 // pred_check
      _
    $region23: #{convnet_two_sides.1} parent=1 // pred_check_branch
      %48 = sbr.rel (0) target = $region25
    $region24: #{convnet_two_sides.1} parent=1 // pred_region
      %s50 = ssub.s32 16, 16
      %51 = vsyncadd [#allocation6], %s50
      %s53 = sshll.u32 [#allocation7], 4
      %s54 = int_to_ptr.vmem [resolvable:$true] %s53
      %56 = dma.hbm_to_vmem [thread:$0]  %s5, 16, %s54, [#allocation6]
    $region25: #{convnet_two_sides.1} parent=1 // pred_fallthru
      _
    // Predicated region
    $region26: #{convnet_two_sides.1} parent=1 // pred_check
      _
    $region27: #{convnet_two_sides.1} parent=1 // pred_check_branch
      %58 = sbr.rel (0) target = $region29
    $region28: #{convnet_two_sides.1} parent=1 // pred_region
      %s60 = ssub.s32 1024, 1024
      %61 = vsyncadd [#allocation9], %s60
      %s62 = sshll.u32 [#allocation8], 4
      %s63 = int_to_ptr.vmem [resolvable:$true] %s62
      %68 = dma.hbm_to_vmem [thread:$0]  %s6, 1024, %s63, [#allocation9], 64, 64, 4
    $region29: #{convnet_two_sides.1} parent=1 // pred_fallthru
      _
    // Predicated region
    $region30: #{convnet_two_sides.1} parent=1 // pred_check
      _
    $region31: #{convnet_two_sides.1} parent=1 // pred_check_branch
      %70 = sbr.rel (0) target = $region33
    $region32: #{convnet_two_sides.1} parent=1 // pred_region
      %s72 = ssub.s32 1024, 1024
      %73 = vsyncadd [#allocation9], %s72
      %s74 = sshll.u32 [#allocation10], 4
      %s75 = int_to_ptr.vmem [resolvable:$true] %s74
      %80 = dma.hbm_to_vmem [thread:$0]  %s7, 1024, %s75, [#allocation9], 64, 64, 4
    $region33: #{convnet_two_sides.1} parent=1 // pred_fallthru
      _
    // Predicated region
    $region34: #{convnet_two_sides.1} parent=1 // pred_check
      _
    $region35: #{convnet_two_sides.1} parent=1 // pred_check_branch
      %82 = sbr.rel (0) target = $region37
    $region36: #{convnet_two_sides.1} parent=1 // pred_region
      %s84 = ssub.s32 16, 16
      %85 = vsyncadd [#allocation12], %s84
      %s87 = sshll.u32 [#allocation11], 4
      %s88 = int_to_ptr.vmem [resolvable:$true] %s87
      %90 = dma.hbm_to_vmem [thread:$0]  %s8, 16, %s88, [#allocation12]
    $region37: #{convnet_two_sides.1} parent=1 // pred_fallthru
      _
    // Predicated region
    $region38: #{convnet_two_sides.1} parent=1 // pred_check
      _
    $region39: #{convnet_two_sides.1} parent=1 // pred_check_branch
      %92 = sbr.rel (0) target = $region41
    $region40: #{convnet_two_sides.1} parent=1 // pred_region
      %93 = dma.done [#allocation3], 16
    $region41: #{convnet_two_sides.1} parent=1 // pred_fallthru
      _
    // Predicated region
    $region42: #{convnet_two_sides.1} parent=1 // pred_check
      _
    $region43: #{convnet_two_sides.1} parent=1 // pred_check_branch
      %95 = sbr.rel (0) target = $region45
    $region44: #{convnet_two_sides.1} parent=1 // pred_region
      %96 = dma.done [#allocation6], 128
    $region45: #{convnet_two_sides.1} parent=1 // pred_fallthru
      _
    // Predicated region
    $region46: #{convnet_two_sides.1} parent=1 // pred_check
      _
    $region47: #{convnet_two_sides.1} parent=1 // pred_check_branch
      %98 = sbr.rel (0) target = $region49
    $region48: #{convnet_two_sides.1} parent=1 // pred_region
      %99 = dma.done [#allocation6], 16
    $region49: #{convnet_two_sides.1} parent=1 // pred_fallthru
      _
    // Predicated region
    $region50: #{convnet_two_sides.1} parent=1 // pred_check
      _
    $region51: #{convnet_two_sides.1} parent=1 // pred_check_branch
      %101 = sbr.rel (0) target = $region53
    $region52: #{convnet_two_sides.1} parent=1 // pred_region
      %102 = dma.done [#allocation9], 1024
    $region53: #{convnet_two_sides.1} parent=1 // pred_fallthru
      _
    // Predicated region
    $region54: #{convnet_two_sides.1} parent=1 // pred_check
      _
    $region55: #{convnet_two_sides.1} parent=1 // pred_check_branch
      %104 = sbr.rel (0) target = $region57
    $region56: #{convnet_two_sides.1} parent=1 // pred_region
      %105 = dma.done [#allocation9], 1024
    $region57: #{convnet_two_sides.1} parent=1 // pred_fallthru
      _
    // Predicated region
    $region58: #{convnet_two_sides.1} parent=1 // pred_check
      _
    $region59: #{convnet_two_sides.1} parent=1 // pred_check_branch
      %107 = sbr.rel (0) target = $region61
    $region60: #{convnet_two_sides.1} parent=1 // pred_region
      %108 = dma.done [#allocation12], 16
    $region61: #{convnet_two_sides.1} parent=1 // pred_fallthru
      _
    %v110 = vld [vmem:[%s0] sm:$0x3]
    %v111 = vpack.c.bf16 %v110, %v110
    %v112 = vld [vmem:[%s1] sm:$0x3]
    %v113 = vpack.c.bf16 %v112, %v112
    %v114 = vld [vmem:[%s2] sm:$0xf]
    %v115 = vld [vmem:[%s2 + $0x4] sm:$0xf]
    %v116 = vld [vmem:[%s2 + $0x8] sm:$0xf]
    %v117 = vld [vmem:[%s2 + $0xc] sm:$0xf]
    %v118 = vld [vmem:[%s2 + $0x10] sm:$0xf]
    %v119 = vld [vmem:[%s2 + $0x14] sm:$0xf]
    %v120 = vld [vmem:[%s2 + $0x18] sm:$0xf]
    %v121 = vld [vmem:[%s2 + $0x1c] sm:$0xf]
    %v122 = vld [vmem:[#allocation2] sm:$0x1]
    %v124 = vlaneseq
    %v125 = vshrl.u32 %v124, 7
    %v126 = vsub.s32 0, %v125
    %v127 = vrot.slane %v122, %v126
    %v137 = vunpack.c.l.b16 %v114
    %v138 = vunpack.c.l.b16 %v115
    %v139 = vunpack.c.l.b16 %v116
    %v140 = vunpack.c.l.b16 %v117
    %v141 = vunpack.c.l.b16 %v118
    %v142 = vunpack.c.l.b16 %v119
    %v143 = vunpack.c.l.b16 %v120
    %v144 = vunpack.c.l.b16 %v121
    %v145 = vpack.c.b16 %v138, %v137
    %v146 = vpack.c.b16 %v140, %v139
    %v147 = vpack.c.b16 %v142, %v141
    %v148 = vpack.c.b16 %v144, %v143
    %vm153 = vcmask 523264
    %v155 = vsel %vm153, %v111, 0
    %157 = vmatprep.subr.bf16.mxu0 0
    %158 = vmatpush1.bf16.msra.mxu0 0
    %159 = vmatprep.subr.bf16.mxu0 0
    %160 = vmatpush1.bf16.msra.mxu0 0
    %161 = vmatprep.subr.bf16.mxu0 0
    %162 = vmatpush1.bf16.msra.mxu0 0
    %163 = vmatprep.subr.bf16.mxu0 0
    %164 = vmatpush1.bf16.msra.mxu0 0
    %165 = vmatprep.subr.bf16.mxu0 0
    %166 = vmatpush1.bf16.msra.mxu0 %v148
    %167 = vmatprep.subr.bf16.mxu0 0
    %168 = vmatpush1.bf16.msra.mxu0 %v147
    %169 = vmatprep.subr.bf16.mxu0 0
    %170 = vmatpush1.bf16.msra.mxu0 %v146
    %171 = vmatprep.subr.bf16.mxu0 0
    %172 = vmatpush1.bf16.msra.mxu0 %v145
    %173 = vmatprep.subr.bf16.mxu0 0
    %174 = vmatpush2.bf16.msra.mxu0 0
    %175 = vmatprep.subr.bf16.mxu0 0
    %176 = vmatpush2.bf16.msra.mxu0 0
    %177 = vmatprep.subr.bf16.mxu0 0
    %178 = vmatpush2.bf16.msra.mxu0 0
    %179 = vmatprep.subr.bf16.mxu0 0
    %180 = vmatpush2.bf16.msra.mxu0 0
    %181 = vmatprep.subr.bf16.mxu0 0
    %182 = vmatpush2.bf16.msra.mxu0 0
    %183 = vmatprep.subr.bf16.mxu0 0
    %184 = vmatpush2.bf16.msra.mxu0 0
    %185 = vmatprep.subr.bf16.mxu0 0
    %186 = vmatpush2.bf16.msra.mxu0 0
    %187 = vmatprep.subr.bf16.mxu0 0
    %188 = vmatpush2.bf16.msra.mxu0 0
    %189 = vmatprep.mubr.bf16.mxu0 0
    %190 = vmatmul.mubr.bf16.gmra.mxu0 %v155
    %v191 = vpop.f32.mrf.mxu0
    %v192 = vadd.f32 %v127, %v191
    %v193 = vpop.f32.mrf.mxu0
    %v194 = vpop.f32.mrf.mxu0
    %v195 = vpop.f32.mrf.mxu0
    %196 = vdwg.mxu0
    %v197 = vmax.f32 %v192, 0.0
    %v198 = vpack.c.bf16 %v197, %v197
    %v199 = vld [vmem:[#allocation5] sm:$0xf]
    %v200 = vld [vmem:[#allocation5 + $0x4] sm:$0xf]
    %v203 = vunpack.c.l.b16 %v199
    %v204 = vunpack.c.l.b16 %v200
    %v205 = vpack.c.b16 %v204, %v203
    %vm207 = vcmask 130048
    %v209 = vsel %vm207, %v113, 0
    %211 = vmatprep.subr.bf16.mxu0 0
    %212 = vmatpush1.bf16.msra.mxu0 0
    %213 = vmatprep.subr.bf16.mxu0 0
    %214 = vmatpush1.bf16.msra.mxu0 0
    %215 = vmatprep.subr.bf16.mxu0 0
    %216 = vmatpush1.bf16.msra.mxu0 0
    %217 = vmatprep.subr.bf16.mxu0 0
    %218 = vmatpush1.bf16.msra.mxu0 0
    %219 = vmatprep.subr.bf16.mxu0 0
    %220 = vmatpush1.bf16.msra.mxu0 0
    %221 = vmatprep.subr.bf16.mxu0 0
    %222 = vmatpush1.bf16.msra.mxu0 0
    %223 = vmatprep.subr.bf16.mxu0 0
    %224 = vmatpush1.bf16.msra.mxu0 0
    %225 = vmatprep.subr.bf16.mxu0 0
    %226 = vmatpush1.bf16.msra.mxu0 %v205
    %227 = vmatprep.subr.bf16.mxu0 0
    %228 = vmatpush2.bf16.msra.mxu0 0
    %229 = vmatprep.subr.bf16.mxu0 0
    %230 = vmatpush2.bf16.msra.mxu0 0
    %231 = vmatprep.subr.bf16.mxu0 0
    %232 = vmatpush2.bf16.msra.mxu0 0
    %233 = vmatprep.subr.bf16.mxu0 0
    %234 = vmatpush2.bf16.msra.mxu0 0
    %235 = vmatprep.subr.bf16.mxu0 0
    %236 = vmatpush2.bf16.msra.mxu0 0
    %237 = vmatprep.subr.bf16.mxu0 0
    %238 = vmatpush2.bf16.msra.mxu0 0
    %239 = vmatprep.subr.bf16.mxu0 0
    %240 = vmatpush2.bf16.msra.mxu0 0
    %241 = vmatprep.subr.bf16.mxu0 0
    %242 = vmatpush2.bf16.msra.mxu0 0
    %243 = vmatprep.mubr.bf16.mxu0 0
    %244 = vmatmul.mubr.bf16.gmra.mxu0 %v209
    %v245 = vpop.f32.mrf.mxu0
    %v246 = vadd.f32 0.0, %v245
    %v247 = vpop.f32.mrf.mxu0
    %v248 = vpop.f32.mrf.mxu0
    %v249 = vpop.f32.mrf.mxu0
    %250 = vdwg.mxu0
    %v251 = vld [vmem:[#allocation8] sm:$0xf]
    %v252 = vld [vmem:[#allocation8 + $0x4] sm:$0xf]
    %v253 = vld [vmem:[#allocation8 + $0x8] sm:$0xf]
    %v254 = vld [vmem:[#allocation8 + $0xc] sm:$0xf]
    %v255 = vld [vmem:[#allocation8 + $0x10] sm:$0xf]
    %v256 = vld [vmem:[#allocation8 + $0x14] sm:$0xf]
    %v257 = vld [vmem:[#allocation8 + $0x18] sm:$0xf]
    %v258 = vld [vmem:[#allocation8 + $0x1c] sm:$0xf]
    %v259 = vld [vmem:[#allocation8 + $0x20] sm:$0xf]
    %v260 = vld [vmem:[#allocation8 + $0x24] sm:$0xf]
    %v261 = vld [vmem:[#allocation8 + $0x28] sm:$0xf]
    %v262 = vld [vmem:[#allocation8 + $0x2c] sm:$0xf]
    %v263 = vld [vmem:[#allocation8 + $0x30] sm:$0xf]
    %v264 = vld [vmem:[#allocation8 + $0x34] sm:$0xf]
    %v265 = vld [vmem:[#allocation8 + $0x38] sm:$0xf]
    %v266 = vld [vmem:[#allocation8 + $0x3c] sm:$0xf]
    %v283 = vunpack.c.l.b16 %v251
    %v284 = vunpack.c.l.b16 %v252
    %v285 = vunpack.c.l.b16 %v253
    %v286 = vunpack.c.l.b16 %v254
    %v287 = vunpack.c.l.b16 %v255
    %v288 = vunpack.c.l.b16 %v256
    %v289 = vunpack.c.l.b16 %v257
    %v290 = vunpack.c.l.b16 %v258
    %v291 = vunpack.c.l.b16 %v259
    %v292 = vunpack.c.l.b16 %v260
    %v293 = vunpack.c.l.b16 %v261
    %v294 = vunpack.c.l.b16 %v262
    %v295 = vunpack.c.l.b16 %v263
    %v296 = vunpack.c.l.b16 %v264
    %v297 = vunpack.c.l.b16 %v265
    %v298 = vunpack.c.l.b16 %v266
    %v299 = vpack.c.b16 %v284, %v283
    %v300 = vpack.c.b16 %v286, %v285
    %v301 = vpack.c.b16 %v288, %v287
    %v302 = vpack.c.b16 %v290, %v289
    %v303 = vpack.c.b16 %v292, %v291
    %v304 = vpack.c.b16 %v294, %v293
    %v305 = vpack.c.b16 %v296, %v295
    %v306 = vpack.c.b16 %v298, %v297
    %315 = vmatprep.subr.bf16.mxu0 0
    %316 = vmatpush1.bf16.msra.mxu0 %v306
    %317 = vmatprep.subr.bf16.mxu0 0
    %318 = vmatpush1.bf16.msra.mxu0 %v305
    %319 = vmatprep.subr.bf16.mxu0 0
    %320 = vmatpush1.bf16.msra.mxu0 %v304
    %321 = vmatprep.subr.bf16.mxu0 0
    %322 = vmatpush1.bf16.msra.mxu0 %v303
    %323 = vmatprep.subr.bf16.mxu0 0
    %324 = vmatpush1.bf16.msra.mxu0 %v302
    %325 = vmatprep.subr.bf16.mxu0 0
    %326 = vmatpush1.bf16.msra.mxu0 %v301
    %327 = vmatprep.subr.bf16.mxu0 0
    %328 = vmatpush1.bf16.msra.mxu0 %v300
    %329 = vmatprep.subr.bf16.mxu0 0
    %330 = vmatpush1.bf16.msra.mxu0 %v299
    %331 = vmatprep.subr.bf16.mxu0 0
    %332 = vmatpush2.bf16.msra.mxu0 0
    %333 = vmatprep.subr.bf16.mxu0 0
    %334 = vmatpush2.bf16.msra.mxu0 0
    %335 = vmatprep.subr.bf16.mxu0 0
    %336 = vmatpush2.bf16.msra.mxu0 0
    %337 = vmatprep.subr.bf16.mxu0 0
    %338 = vmatpush2.bf16.msra.mxu0 0
    %339 = vmatprep.subr.bf16.mxu0 0
    %340 = vmatpush2.bf16.msra.mxu0 0
    %341 = vmatprep.subr.bf16.mxu0 0
    %342 = vmatpush2.bf16.msra.mxu0 0
    %343 = vmatprep.subr.bf16.mxu0 0
    %344 = vmatpush2.bf16.msra.mxu0 0
    %345 = vmatprep.subr.bf16.mxu0 0
    %346 = vmatpush2.bf16.msra.mxu0 0
    %347 = vmatprep.mubr.bf16.mxu0 0
    %348 = vmatmul.mubr.bf16.gmra.mxu0 %v198
    %v349 = vpop.f32.mrf.mxu0
    %v350 = vadd.f32 %v246, %v349
    %v351 = vpop.f32.mrf.mxu0
    %v352 = vpop.f32.mrf.mxu0
    %v353 = vpop.f32.mrf.mxu0
    %354 = vdwg.mxu0
    %v355 = vld [vmem:[#allocation7] sm:$0x1]
    %v357 = vlaneseq
    %v358 = vshrl.u32 %v357, 7
    %v359 = vsub.s32 0, %v358
    %v360 = vrot.slane %v355, %v359
    %v362 = vadd.f32 %v350, %v360
    %v363 = vmax.f32 %v362, 0.0
    %v364 = vpack.c.bf16 %v363, %v363
    %v365 = vld [vmem:[#allocation10] sm:$0xf]
    %v366 = vld [vmem:[#allocation10 + $0x4] sm:$0xf]
    %v367 = vld [vmem:[#allocation10 + $0x8] sm:$0xf]
    %v368 = vld [vmem:[#allocation10 + $0xc] sm:$0xf]
    %v369 = vld [vmem:[#allocation10 + $0x10] sm:$0xf]
    %v370 = vld [vmem:[#allocation10 + $0x14] sm:$0xf]
    %v371 = vld [vmem:[#allocation10 + $0x18] sm:$0xf]
    %v372 = vld [vmem:[#allocation10 + $0x1c] sm:$0xf]
    %v373 = vld [vmem:[#allocation10 + $0x20] sm:$0xf]
    %v374 = vld [vmem:[#allocation10 + $0x24] sm:$0xf]
    %v375 = vld [vmem:[#allocation10 + $0x28] sm:$0xf]
    %v376 = vld [vmem:[#allocation10 + $0x2c] sm:$0xf]
    %v377 = vld [vmem:[#allocation10 + $0x30] sm:$0xf]
    %v378 = vld [vmem:[#allocation10 + $0x34] sm:$0xf]
    %v379 = vld [vmem:[#allocation10 + $0x38] sm:$0xf]
    %v380 = vld [vmem:[#allocation10 + $0x3c] sm:$0xf]
    %v381 = vld [vmem:[#allocation11] sm:$0x1]
    %v383 = vlaneseq
    %v384 = vshrl.u32 %v383, 7
    %v385 = vsub.s32 0, %v384
    %v386 = vrot.slane %v381, %v385
    %v404 = vunpack.c.l.b16 %v365
    %v405 = vunpack.c.l.b16 %v366
    %v406 = vunpack.c.l.b16 %v367
    %v407 = vunpack.c.l.b16 %v368
    %v408 = vunpack.c.l.b16 %v369
    %v409 = vunpack.c.l.b16 %v370
    %v410 = vunpack.c.l.b16 %v371
    %v411 = vunpack.c.l.b16 %v372
    %v412 = vunpack.c.l.b16 %v373
    %v413 = vunpack.c.l.b16 %v374
    %v414 = vunpack.c.l.b16 %v375
    %v415 = vunpack.c.l.b16 %v376
    %v416 = vunpack.c.l.b16 %v377
    %v417 = vunpack.c.l.b16 %v378
    %v418 = vunpack.c.l.b16 %v379
    %v419 = vunpack.c.l.b16 %v380
    %v420 = vpack.c.b16 %v405, %v404
    %v421 = vpack.c.b16 %v407, %v406
    %v422 = vpack.c.b16 %v409, %v408
    %v423 = vpack.c.b16 %v411, %v410
    %v424 = vpack.c.b16 %v413, %v412
    %v425 = vpack.c.b16 %v415, %v414
    %v426 = vpack.c.b16 %v417, %v416
    %v427 = vpack.c.b16 %v419, %v418
    %436 = vmatprep.subr.bf16.mxu0 0
    %437 = vmatpush1.bf16.msra.mxu0 %v427
    %438 = vmatprep.subr.bf16.mxu0 0
    %439 = vmatpush1.bf16.msra.mxu0 %v426
    %440 = vmatprep.subr.bf16.mxu0 0
    %441 = vmatpush1.bf16.msra.mxu0 %v425
    %442 = vmatprep.subr.bf16.mxu0 0
    %443 = vmatpush1.bf16.msra.mxu0 %v424
    %444 = vmatprep.subr.bf16.mxu0 0
    %445 = vmatpush1.bf16.msra.mxu0 %v423
    %446 = vmatprep.subr.bf16.mxu0 0
    %447 = vmatpush1.bf16.msra.mxu0 %v422
    %448 = vmatprep.subr.bf16.mxu0 0
    %449 = vmatpush1.bf16.msra.mxu0 %v421
    %450 = vmatprep.subr.bf16.mxu0 0
    %451 = vmatpush1.bf16.msra.mxu0 %v420
    %452 = vmatprep.subr.bf16.mxu0 0
    %453 = vmatpush2.bf16.msra.mxu0 0
    %454 = vmatprep.subr.bf16.mxu0 0
    %455 = vmatpush2.bf16.msra.mxu0 0
    %456 = vmatprep.subr.bf16.mxu0 0
    %457 = vmatpush2.bf16.msra.mxu0 0
    %458 = vmatprep.subr.bf16.mxu0 0
    %459 = vmatpush2.bf16.msra.mxu0 0
    %460 = vmatprep.subr.bf16.mxu0 0
    %461 = vmatpush2.bf16.msra.mxu0 0
    %462 = vmatprep.subr.bf16.mxu0 0
    %463 = vmatpush2.bf16.msra.mxu0 0
    %464 = vmatprep.subr.bf16.mxu0 0
    %465 = vmatpush2.bf16.msra.mxu0 0
    %466 = vmatprep.subr.bf16.mxu0 0
    %467 = vmatpush2.bf16.msra.mxu0 0
    %468 = vmatprep.mubr.bf16.mxu0 0
    %469 = vmatmul.mubr.bf16.gmra.mxu0 %v364
    %v470 = vpop.f32.mrf.mxu0
    %v471 = vadd.f32 %v386, %v470
    %v472 = vpop.f32.mrf.mxu0
    %v473 = vpop.f32.mrf.mxu0
    %v474 = vpop.f32.mrf.mxu0
    %475 = vdwg.mxu0
    %476 = vst [vmem:[#allocation13] sm:$0x3] %v471
    // Predicated region
    $region62: #{convnet_two_sides.1} parent=1 // pred_check
      _
    $region63: #{convnet_two_sides.1} parent=1 // pred_check_branch
      %478 = sbr.rel (0) target = $region65
    $region64: #{convnet_two_sides.1} parent=1 // pred_region
      %s480 = ssub.s32 32, 32
      %481 = vsyncadd [#allocation4], %s480
      %s483 = sshll.u32 [#allocation13], 4
      %s484 = int_to_ptr.vmem [resolvable:$true] %s483
      %486 = dma.vmem_to_hbm [thread:$0]  %s484, 32, %s9, [#allocation4]
    $region65: #{convnet_two_sides.1} parent=1 // pred_fallthru
      _
    // Predicated region
    $region66: #{convnet_two_sides.1} parent=1 // pred_check
      _
    $region67: #{convnet_two_sides.1} parent=1 // pred_check_branch
      %488 = sbr.rel (0) target = $region69
    $region68: #{convnet_two_sides.1} parent=1 // pred_region
      %489 = dma.done [#allocation4], 32
    $region69: #{convnet_two_sides.1} parent=1 // pred_fallthru
      _
    %490 = vsyncpa [#allocation3], 1
    %491 = vsyncpa [#allocation6], 1
    %492 = vsyncpa [#allocation9], 1
    %493 = vsyncpa [#allocation12], 1
    %494 = vsyncpa [#allocation4], 1

</llo_original>
